<compile_context>
chip_gen: v7x
topology: tpu7x:2x2x1
jax: 0.10.0
libtpu: 0.0.40
codegen_flags: <defaults>
</compile_context>

<pallas_src>
import functools

import jax
import jax.numpy as jnp
from jax.experimental import pallas as pl
from jax.experimental.pallas import tpu as pltpu

_LANE = 128


# ---------------------------------------------------------------------------
# Hardware queries (guarded; fall back to conservative v7x-sized defaults)
# ---------------------------------------------------------------------------
def _tpu_vmem_capacity_bytes():
    try:
        cap = int(pltpu.get_tpu_info().vmem_capacity_bytes)
        if cap > 0:
            return cap
    except Exception:
        pass
    return 64 * 1024 * 1024          # conservative default (v7x: 64 MiB)


def _tensorcores_per_chip():
    try:
        info = pltpu.get_tpu_info()
        for attr in ("num_cores", "tensorcores_per_chip", "core_count"):
            v = getattr(info, attr, None)
            if isinstance(v, int) and v > 0:
                return v
    except Exception:
        pass
    try:
        kind = (getattr(jax.devices()[0], "device_kind", "") or "").lower()
        if "v7" in kind:
            return 2
    except Exception:
        pass
    return 1


# ---------------------------------------------------------------------------
# Kernels
# ---------------------------------------------------------------------------
def _eca_fused_kernel(w_ref, x_ref, o_ref, spad_ref):
    """Single-pass ECA for one batch element.

    w_ref:    (3,) f32 in SMEM     -- Conv1d(1, 1, k=3, bias=False) weights
    x_ref:    (1, C, HW) in VMEM   -- NCHW batch slice, spatial flattened onto lanes
    o_ref:    (1, C, HW) in VMEM
    spad_ref: (C + 2, 1) f32 VMEM  -- zero-padded pooled vector (scratch)
    """
    x = x_ref[0]                                    # (C, HW), native dtype
    c, hw = x.shape

    # Global average pool over spatial (lane axis); accumulate in f32.
    s = jnp.sum(x, axis=1, keepdims=True, dtype=jnp.float32) * (1.0 / hw)   # (C, 1)

    # k=3 zero-padded conv across channels as a 3-tap FMA over shifted windows
    # of a zero-padded copy of the pooled vector (O(C); no CxC band, no MXU).
    # NOTE: kept as a tiny VMEM scratch (robust lowering for small/unaligned C);
    # a pltpu.roll-based variant would save a few VALU/VMEM ops but the kernel
    # is HBM-bound, so this is not the binding slot.
    spad_ref[...] = jnp.zeros_like(spad_ref)
    spad_ref[pl.ds(1, c), :] = s
    conv = (w_ref[0] * spad_ref[pl.ds(0, c), :]     # s[ch - 1], zero at ch = 0
            + w_ref[1] * s                          # s[ch]
            + w_ref[2] * spad_ref[pl.ds(2, c), :])  # s[ch + 1], zero at ch = C-1
    gate = jax.nn.sigmoid(conv)                     # (C, 1) f32

    # Channel-wise gating in the input dtype (bf16 stays bf16 on the VPU).
    o_ref[0] = x * gate.astype(x.dtype)


def _eca_pool_kernel(x_ref, sum_ref, *, mask_last, hw_total, hw_tile):
    """Accumulate per-channel spatial sums. grid = (B, C_tiles, HW_tiles)."""
    t = pl.program_id(2)

    @pl.when(t == 0)
    def _():
        sum_ref[...] = jnp.zeros_like(sum_ref)

    x = x_ref[0]                                    # (c_tile, hw_tile)

    def _accum(xv):
        sum_ref[0] += jnp.sum(xv, axis=1, keepdims=True, dtype=jnp.float32)

    if mask_last:
        last = pl.num_programs(2) - 1

        @pl.when(t < last)
        def _():
            _accum(x)                               # full tiles: no masking work

        @pl.when(t == last)
        def _():                                    # ragged tail: mask once
            col = jax.lax.broadcasted_iota(jnp.int32, x.shape, 1) + t * hw_tile
            _accum(jnp.where(col < hw_total, x, 0))
    else:
        _accum(x)


def _eca_gate_kernel(g_ref, x_ref, o_ref):
    """Apply the precomputed per-channel sigmoid gate to one (c_tile, hw_tile) tile."""
    x = x_ref[0]                                    # (c_tile, hw_tile)
    o_ref[0] = x * g_ref[0].astype(x.dtype)         # broadcast (c_tile, 1) over lanes


# ---------------------------------------------------------------------------
# Wrappers
# ---------------------------------------------------------------------------
def _eca_fused(x, w, *, vmem_limit_bytes):
    B, C, HW = x.shape
    itemsize = x.dtype.itemsize
    return pl.pallas_call(
        _eca_fused_kernel,
        out_shape=jax.ShapeDtypeStruct((B, C, HW), x.dtype),
        grid=(B,),
        in_specs=[
            pl.BlockSpec(memory_space=pltpu.MemorySpace.SMEM),    # conv weights
            pl.BlockSpec((1, C, HW), lambda b: (b, 0, 0)),        # x batch slice
        ],
        out_specs=pl.BlockSpec((1, C, HW), lambda b: (b, 0, 0)),
        scratch_shapes=[pltpu.VMEM((C + 2, 1), jnp.float32)],
        compiler_params=pltpu.CompilerParams(
            dimension_semantics=("parallel",),
            vmem_limit_bytes=vmem_limit_bytes,
        ),
        cost_estimate=pl.CostEstimate(
            flops=2 * B * C * HW,
            transcendentals=B * C,
            bytes_accessed=2 * B * C * HW * itemsize),
    )(w, x)


def _eca_two_pass(x, w, *, c_tile, hw_tile_pool, hw_tile_gate, vmem_limit_bytes):
    B, C, HW = x.shape
    itemsize = x.dtype.itemsize
    n_c = pl.cdiv(C, c_tile)
    n_tp = pl.cdiv(HW, hw_tile_pool)
    n_tg = pl.cdiv(HW, hw_tile_gate)

    # Pass 1: per-channel sums (batch/channel parallel; HW reduction last).
    sums = pl.pallas_call(
        functools.partial(_eca_pool_kernel,
                          mask_last=(HW % hw_tile_pool != 0),
                          hw_total=HW, hw_tile=hw_tile_pool),
        out_shape=jax.ShapeDtypeStruct((B, C, 1), jnp.float32),
        grid=(B, n_c, n_tp),
        in_specs=[pl.BlockSpec((1, c_tile, hw_tile_pool), lambda b, c, t: (b, c, t))],
        out_specs=pl.BlockSpec((1, c_tile, 1), lambda b, c, t: (b, c, 0)),
        compiler_params=pltpu.CompilerParams(
            dimension_semantics=("parallel", "parallel", "arbitrary"),
            vmem_limit_bytes=vmem_limit_bytes,
        ),
        cost_estimate=pl.CostEstimate(
            flops=B * C * HW, transcendentals=0,
            bytes_accessed=B * C * HW * itemsize + B * C * 4),
    )(x)

    # k=3 zero-padded channel conv + sigmoid on the tiny (B, C) vector (plain JAX).
    y = sums[:, :, 0] * (1.0 / HW)
    yp = jnp.pad(y, ((0, 0), (1, 1)))
    conv = w[0] * yp[:, :C] + w[1] * yp[:, 1:C + 1] + w[2] * yp[:, 2:C + 2]
    gate = jax.nn.sigmoid(conv)[:, :, None]         # (B, C, 1) f32

    # Pass 2: gating, fully parallel over (batch, channel tiles, HW tiles).
    return pl.pallas_call(
        _eca_gate_kernel,
        out_shape=jax.ShapeDtypeStruct((B, C, HW), x.dtype),
        grid=(B, n_c, n_tg),
        in_specs=[
            pl.BlockSpec((1, c_tile, 1), lambda b, c, t: (b, c, 0)),
            pl.BlockSpec((1, c_tile, hw_tile_gate), lambda b, c, t: (b, c, t)),
        ],
        out_specs=pl.BlockSpec((1, c_tile, hw_tile_gate), lambda b, c, t: (b, c, t)),
        compiler_params=pltpu.CompilerParams(
            dimension_semantics=("parallel", "parallel", "parallel"),
            vmem_limit_bytes=vmem_limit_bytes,
        ),
        cost_estimate=pl.CostEstimate(
            flops=B * C * HW, transcendentals=0,
            bytes_accessed=2 * B * C * HW * itemsize + B * C * 4),
    )(gate, x)


@functools.partial(jax.jit, static_argnames=("force_hw_tile", "force_c_tile"))
def eca_forward(x_nchw, conv_weight, *, force_hw_tile=None, force_c_tile=None):
    """ECABlock forward. x_nchw: (B, C, H, W); conv_weight: (1, 1, 3) PyTorch layout."""
    B, C, H, W = x_nchw.shape
    HW = H * W
    itemsize = x_nchw.dtype.itemsize
    w = conv_weight.reshape(3).astype(jnp.float32)
    x = x_nchw.reshape(B, C, HW)                    # free row-major reshape, no transpose

    vmem_cap = _tpu_vmem_capacity_bytes()           # 128 MiB v5e/v6e, 64 MiB v7x
    n_tc = _tensorcores_per_chip()

    # Fused-path VMEM residency: (in + out) blocks, double-buffered over the
    # batch grid, plus the lane-padded pooled-vector scratch.
    spad_bytes = (C + 2 + 8) * _LANE * 4
    fused_resident = 4 * C * HW * itemsize + spad_bytes
    fused_threshold = (3 * vmem_cap) // 4           # ~96 MiB v5e/v6e, ~48 MiB v7x

    # B == 1 on a 2-TensorCore chip: the fused grid=(B,) can only occupy one
    # core; for large maps the C-split two-pass grid (both cores) wins.
    prefer_two_pass = (B == 1 and n_tc >= 2 and C * HW * itemsize >= (8 << 20))

    use_two_pass = (force_hw_tile is not None or force_c_tile is not None
                    or prefer_two_pass or fused_resident > fused_threshold)

    if not use_two_pass:
        # Limit = actual residency + slack, clamped below physical VMEM
        # (fused_resident already includes double buffering).
        vmem_limit = int(min(vmem_cap, max(fused_resident + (4 << 20), 16 << 20)))
        out = _eca_fused(x, w, vmem_limit_bytes=vmem_limit)
    else:
        tiled_budget = min(32 << 20, vmem_cap // 2)   # 32 MiB v5e/v6e/v7x

        # Channel tile: full C, unless (a) splitting buys dual-core parallelism
        # for B == 1, or (b) even a 128-lane tile would blow the budget.
        if force_c_tile is not None:
            c_tile = int(force_c_tile)
        else:
            c_tile = C
            if B == 1 and n_tc >= 2 and C % 16 == 0:
                c_tile = C // 2
            min_hw = min(HW, _LANE)
            max_c_tile = max(8, (tiled_budget // (4 * min_hw * itemsize)) // 8 * 8)
            if C > max_c_tile and c_tile > max_c_tile:
                c_tile = max_c_tile
        c_tile = min(c_tile, C)

        # HW tiles: pool pass only streams x in (tiny resident accumulator) so
        # it gets ~2x the gate pass tile, which streams x in AND out.
        if force_hw_tile is not None:
            hw_tile_gate = hw_tile_pool = min(int(force_hw_tile), HW)
        else:
            hw_tile_gate = max(_LANE,
                               (tiled_budget // (4 * c_tile * itemsize)) // _LANE * _LANE)
            hw_tile_pool = max(_LANE,
                               (tiled_budget // (2 * c_tile * itemsize)) // _LANE * _LANE)
            hw_tile_gate = min(hw_tile_gate, HW)
            hw_tile_pool = min(hw_tile_pool, HW)

        pool_bytes = 2 * c_tile * hw_tile_pool * itemsize
        gate_bytes = 4 * c_tile * hw_tile_gate * itemsize
        vmem_limit = int(min(vmem_cap,
                             max(max(pool_bytes, gate_bytes) + (4 << 20), 16 << 20)))
        out = _eca_two_pass(x, w, c_tile=c_tile, hw_tile_pool=hw_tile_pool,
                            hw_tile_gate=hw_tile_gate, vmem_limit_bytes=vmem_limit)
    return out.reshape(B, C, H, W)


# ---------------------------------------------------------------------------
# Reference + test
# ---------------------------------------------------------------------------
def eca_reference(x_nchw, conv_weight):
    """Pure-JAX reference of the PyTorch ECABlock forward."""
    B, C, H, W = x_nchw.shape
    y = jnp.mean(x_nchw.astype(jnp.float32), axis=(2, 3))          # (B, C)
    w = conv_weight.reshape(3).astype(jnp.float32)
    yp = jnp.pad(y, ((0, 0), (1, 1)))                               # zero pad channels
    conv = w[0] * yp[:, :C] + w[1] * yp[:, 1:C + 1] + w[2] * yp[:, 2:C + 2]
    gate = jax.nn.sigmoid(conv)                                     # (B, C)
    return (x_nchw.astype(jnp.float32) * gate[:, :, None, None]).astype(x_nchw.dtype)


if __name__ == "__main__":
    key = jax.random.PRNGKey(0)
    kx, kw = jax.random.split(key)

    B, C, H, W = 2, 4, 16, 16
    x = jax.random.normal(kx, (B, C, H, W), dtype=jnp.float32)

    # Deterministic Conv1d(1, 1, k=3, bias=False) weight, PyTorch-style init:
    # kaiming_uniform(a=sqrt(5)) -> U(-1/sqrt(fan_in), 1/sqrt(fan_in)), fan_in = 3.
    bound = 1.0 / jnp.sqrt(3.0)
    conv_weight = jax.random.uniform(kw, (1, 1, 3), minval=-bound, maxval=bound,
                                     dtype=jnp.float32)

    ref = eca_reference(x, conv_weight)

    # 1) Fused single-pass path (one HBM read + one HBM write of x).
    out = jax.block_until_ready(eca_forward(x, conv_weight))
    assert out.shape == (B, C, H, W)
    assert jnp.allclose(out, ref, atol=1e-5, rtol=1e-5), "fused path mismatch"

    # 2) HW-tiled two-pass fallback (forced here; auto-selected for large maps).
    out_tiled = jax.block_until_ready(eca_forward(x, conv_weight, force_hw_tile=128))
    assert jnp.allclose(out_tiled, ref, atol=1e-5, rtol=1e-5), "tiled path mismatch"

    # 3) Two-pass with a channel split and a ragged last HW tile (exercises the
    #    masked final pool tile and the C-tiled grid used for B == 1 on 2-TC chips).
    x2 = jax.random.normal(kx, (1, 32, 18, 18), dtype=jnp.float32)
    ref2 = eca_reference(x2, conv_weight)
    out2 = jax.block_until_ready(
        eca_forward(x2, conv_weight, force_hw_tile=128, force_c_tile=16))
    assert jnp.allclose(out2, ref2, atol=1e-5, rtol=1e-5), "c-split/ragged path mismatch"

    # 4) bf16 input: gating runs natively in bf16 (pool still accumulates in f32).
    xb = x.astype(jnp.bfloat16)
    ref_b = eca_reference(xb, conv_weight).astype(jnp.float32)
    out_b = jax.block_until_ready(eca_forward(xb, conv_weight)).astype(jnp.float32)
    assert jnp.allclose(out_b, ref_b, atol=5e-2, rtol=5e-2), "bf16 path mismatch"

    print("KERNEL_OK")
</pallas_src>

<mosaic_0001>
module attributes {stable_mosaic.version = 11 : i64} {
  func.func @_eca_fused_kernel(%arg0: i32, %arg1: memref<3xf32, #tpu.memory_space<smem>>, %arg2: memref<1x4x256xf32, #tpu.memory_space<vmem>>, %arg3: memref<1x4x256xf32, #tpu.memory_space<vmem>>, %arg4: memref<6x1xf32, #tpu.memory_space<vmem>>) attributes {dimension_semantics = [#tpu.dimension_semantics<parallel>], iteration_bounds = array<i64: 2>, scalar_prefetch = 0 : i64, scratch_operands = 1 : i64, tpu.core_type = #tpu.core_type<tc>, window_params = [{transform_indices = @transform_0, window_bounds = array<i64: 3>}, {transform_indices = @transform_1, window_bounds = array<i64: 1, 4, 256>}, {transform_indices = @transform_2, window_bounds = array<i64: 1, 4, 256>}]} {
    %c0 = arith.constant 0 : index
    %c0_0 = arith.constant 0 : index
    %c0_1 = arith.constant 0 : index
    %0 = vector.load %arg2[%c0, %c0_0, %c0_1] : memref<1x4x256xf32, #tpu.memory_space<vmem>>, vector<1x4x256xf32>
    %1 = vector.shape_cast %0 : vector<1x4x256xf32> to vector<4x256xf32>
    %cst = arith.constant dense<0.000000e+00> : vector<4xf32>
    %2 = vector.multi_reduction <add>, %1, %cst [1] : vector<4x256xf32> to vector<4xf32>
    %3 = vector.shape_cast %2 : vector<4xf32> to vector<4x1xf32>
    %cst_2 = arith.constant 3.906250e-03 : f32
    %4 = vector.broadcast %cst_2 : f32 to vector<4x1xf32>
    %5 = arith.mulf %3, %4 : vector<4x1xf32>
    %cst_3 = arith.constant 0.000000e+00 : f32
    %6 = vector.broadcast %cst_3 : f32 to vector<6x1xf32>
    %c0_4 = arith.constant 0 : index
    %c0_5 = arith.constant 0 : index
    %7 = vector.load %arg4[%c0_4, %c0_5] : memref<6x1xf32, #tpu.memory_space<vmem>>, vector<6x1xf32>
    tpu.vector_store %arg4[%c0_4, %c0_5], %6 {strides = array<i32>} : memref<6x1xf32, #tpu.memory_space<vmem>>, vector<6x1xf32>,
    %c1 = arith.constant 1 : index
    %c0_6 = arith.constant 0 : index
    %8 = vector.load %arg4[%c1, %c0_6] : memref<6x1xf32, #tpu.memory_space<vmem>>, vector<4x1xf32>
    tpu.vector_store %arg4[%c1, %c0_6], %5 {strides = array<i32>} : memref<6x1xf32, #tpu.memory_space<vmem>>, vector<4x1xf32>,
    %c0_7 = arith.constant 0 : index
    %9 = memref.load %arg1[%c0_7] : memref<3xf32, #tpu.memory_space<smem>>
    %c0_8 = arith.constant 0 : index
    %c0_9 = arith.constant 0 : index
    %10 = vector.load %arg4[%c0_8, %c0_9] : memref<6x1xf32, #tpu.memory_space<vmem>>, vector<4x1xf32>
    %11 = vector.broadcast %9 : f32 to vector<4x1xf32>
    %12 = arith.mulf %11, %10 : vector<4x1xf32>
    %c1_10 = arith.constant 1 : index
    %13 = memref.load %arg1[%c1_10] : memref<3xf32, #tpu.memory_space<smem>>
    %14 = vector.broadcast %13 : f32 to vector<4x1xf32>
    %15 = arith.mulf %14, %5 : vector<4x1xf32>
    %16 = arith.addf %12, %15 : vector<4x1xf32>
    %c2 = arith.constant 2 : index
    %17 = memref.load %arg1[%c2] : memref<3xf32, #tpu.memory_space<smem>>
    %c2_11 = arith.constant 2 : index
    %c0_12 = arith.constant 0 : index
    %18 = vector.load %arg4[%c2_11, %c0_12] : memref<6x1xf32, #tpu.memory_space<vmem>>, vector<4x1xf32>
    %19 = vector.broadcast %17 : f32 to vector<4x1xf32>
    %20 = arith.mulf %19, %18 : vector<4x1xf32>
    %21 = arith.addf %16, %20 : vector<4x1xf32>
    %22 = arith.negf %21 : vector<4x1xf32>
    %23 = math.exp %22 : vector<4x1xf32>
    %cst_13 = arith.constant 1.000000e+00 : f32
    %24 = vector.broadcast %cst_13 : f32 to vector<4x1xf32>
    %25 = arith.addf %24, %23 : vector<4x1xf32>
    %26 = arith.divf %24, %25 : vector<4x1xf32>
    %27 = vector.broadcast %26 : vector<4x1xf32> to vector<4x256xf32>
    %28 = arith.mulf %1, %27 : vector<4x256xf32>
    %c0_14 = arith.constant 0 : index
    %c0_15 = arith.constant 0 : index
    %c0_16 = arith.constant 0 : index
    %29 = vector.load %arg3[%c0_14, %c0_15, %c0_16] : memref<1x4x256xf32, #tpu.memory_space<vmem>>, vector<1x4x256xf32>
    %30 = vector.shape_cast %29 : vector<1x4x256xf32> to vector<4x256xf32>
    %31 = vector.shape_cast %28 : vector<4x256xf32> to vector<1x4x256xf32>
    tpu.vector_store %arg3[%c0_14, %c0_15, %c0_16], %31 {strides = array<i32>} : memref<1x4x256xf32, #tpu.memory_space<vmem>>, vector<1x4x256xf32>,
    return
  }
  func.func @transform_0(%arg0: i32) -> i32 {
    %c0_i32 = arith.constant 0 : i32
    %c0_i32_0 = arith.constant 0 : i32
    return %c0_i32 : i32
  }
  func.func @transform_1(%arg0: i32) -> (i32, i32, i32) {
    %c0_i32 = arith.constant 0 : i32
    %c0_i32_0 = arith.constant 0 : i32
    %c0_i32_1 = arith.constant 0 : i32
    return %arg0, %c0_i32, %c0_i32_0 : i32, i32, i32
  }
  func.func @transform_2(%arg0: i32) -> (i32, i32, i32) {
    %c0_i32 = arith.constant 0 : i32
    %c0_i32_0 = arith.constant 0 : i32
    %c0_i32_1 = arith.constant 0 : i32
    return %arg0, %c0_i32, %c0_i32_0 : i32, i32, i32
  }
}

</mosaic_0001>

<llo_original>
// kernel: eca_forward.1
$region0: #{eca_forward.1}
  #allocation0 [shape = 'u32[]', space=smem, size = 0x4, offset = 0x4, fixed_abs, tag = 'smem constant byte address 0x4 - core index']
  #allocation1 [shape = 'u32[144,128]{1,0:T(1,128)}', space=vmem, size = 0x12000, scoped, tag = 'internal scratch']
  #allocation2 [shape = 'f32[6,1]{1,0:T(8,128)}', space=vmem, size = 0x1000, scoped, tag = 'scratch operand']
  %s0 = inlined_call_operand.vmem [shape: f32[3], index: 0, kind: input, shape index: {}]
  %s1 = inlined_call_operand.vmem [shape: f32[2,4,256], index: 1, kind: input, shape index: {}]
  %s2 = inlined_call_operand.vmem [shape: f32[2,4,256], index: 2, kind: output, shape index: {}]
  %s3 = sld [smem:[#allocation0]]
  $region45: #{eca_forward.1} parent=0
    _
  %s5 = ssub.s32 1, %s3
  %s6 = scalar_select 0, %s5, %s3
  $region1: #{eca_forward.1} parent=0
    #allocation3 [shape = 'u8[512]{0}', space=smem, size = 0x200, scoped, tag = 'input window, operand 0, single buffered']
    #allocation4 [shape = 's32[2]{0}', space=sflag, size = 0x8, scoped, tag = 'scoped memory for eca_forward.1']
    %7 = vsyncpa [#allocation4], 0
    loop: start=0, step=1, limit=4
    $region2: #{eca_forward.1} parent=1 // loop_pre_header
      _
    $region3: #{eca_forward.1} parent=1 // loop_header
      %s9 = sphi 0, %s13
      %p10 = scmp.ge.s32.totalorder %s9, 4
      %s17 = sphi 0, %s17
      %s19 = sphi 0, %s17
      %s20 = sphi 0, %s19
      %s34 = sphi 0, %s20
      %s40 = sphi 0, %s42
      %s43 = sphi 0, %s40
      %s44 = sphi 0, %s43
      %s60 = sphi 0, %s44
      %s66 = sphi 0, %s68
      %s69 = sphi 0, %s66
      %s70 = sphi 0, %s69
      %s86 = sphi 0, %s70
    $region4: #{eca_forward.1} parent=1 // loop_header_branch
      %12 = sbr.rel (%p10) target = $region8
    $region5: #{eca_forward.1} parent=1 // loop_body
      %s14 = ssub.s32 %s9, 1
      %s15 = ssub.s32 %s9, 2
      %s16 = sadd.s32 %s9, 1
      %s18 = sadd.s32 %s17, 1
      %p21 = scmp.eq.s32.totalorder %s9, 1
      %p22 = scmp.ne.s32.totalorder %s17, %s19
      %p23 = scmp.eq.s32.totalorder %s9, 0
      %p24 = por %p22, %p23
      %p25 = scmp.ne.s32.totalorder %s17, %s19
      %p26 = scmp.eq.s32.totalorder %s14, 1
      %p27 = por %p25, %p26
      %p28 = scmp.ne.s32.totalorder %s19, %s20
      %p29 = scmp.eq.s32.totalorder %s14, 0
      %p30 = por %p28, %p29
      %p31 = scmp.ne.s32.totalorder %s19, %s20
      %p32 = scmp.eq.s32.totalorder %s15, 1
      %p33 = por %p31, %p32
      %p35 = scmp.ne.s32.totalorder %s20, %s34
      %p36 = scmp.eq.s32.totalorder %s15, 0
      %p37 = por %p35, %p36
      %s38 = ssub.s32 %s9, %s16
      %p39 = scmp.eq.s32.totalorder %s38, 0
      %s41 = sadd.s32 %s40, 1
      %s42 = scalar_select %p39, %s40, %s41
      %p45 = pneg %p39
      %p46 = scmp.eq.s32.totalorder %s9, 1
      %p47 = por %p45, %p46
      %p48 = scmp.ne.s32.totalorder %s40, %s43
      %p49 = scmp.eq.s32.totalorder %s9, 0
      %p50 = por %p48, %p49
      %p51 = scmp.ne.s32.totalorder %s40, %s43
      %p52 = scmp.eq.s32.totalorder %s14, 1
      %p53 = por %p51, %p52
      %p54 = scmp.ne.s32.totalorder %s43, %s44
      %p55 = scmp.eq.s32.totalorder %s14, 0
      %p56 = por %p54, %p55
      %p57 = scmp.ne.s32.totalorder %s43, %s44
      %p58 = scmp.eq.s32.totalorder %s15, 1
      %p59 = por %p57, %p58
      %p61 = scmp.ne.s32.totalorder %s44, %s60
      %p62 = scmp.eq.s32.totalorder %s15, 0
      %p63 = por %p61, %p62
      %s64 = ssub.s32 %s9, %s16
      %p65 = scmp.eq.s32.totalorder %s64, 0
      %s67 = sadd.s32 %s66, 1
      %s68 = scalar_select %p65, %s66, %s67
      %p71 = pneg %p65
      %p72 = scmp.eq.s32.totalorder %s9, 1
      %p73 = por %p71, %p72
      %p74 = scmp.ne.s32.totalorder %s66, %s69
      %p75 = scmp.eq.s32.totalorder %s9, 0
      %p76 = por %p74, %p75
      %p77 = scmp.ne.s32.totalorder %s66, %s69
      %p78 = scmp.eq.s32.totalorder %s14, 1
      %p79 = por %p77, %p78
      %p80 = scmp.ne.s32.totalorder %s69, %s70
      %p81 = scmp.eq.s32.totalorder %s14, 0
      %p82 = por %p80, %p81
      %p83 = scmp.ne.s32.totalorder %s69, %s70
      %p84 = scmp.eq.s32.totalorder %s15, 1
      %p85 = por %p83, %p84
      %p87 = scmp.ne.s32.totalorder %s70, %s86
      %p88 = scmp.eq.s32.totalorder %s15, 0
      %p89 = por %p87, %p88
      %p90 = scmp.le.s32.totalorder 1, %s9
      %p91 = scmp.lt.s32.totalorder %s9, 3
      %p92 = pnand %p90, %p91
      %p93 = pneg %p92
      // Predicated region
      $region9: #{eca_forward.1} parent=5 // pred_check
        _
      $region10: #{eca_forward.1} parent=5 // pred_check_branch
        %95 = sbr.rel (%p92) target = $region12
      $region11: #{eca_forward.1} parent=5 // pred_region
        %s96 = ssub.s32 %s9, 1
        // Predicated region
        $region13: #{eca_forward.1} parent=11 // pred_check
          %p97 = pneg %p30
        $region14: #{eca_forward.1} parent=11 // pred_check_branch
          %99 = sbr.rel (%p97) target = $region16
        $region15: #{eca_forward.1} parent=11 // pred_region
          %s101 = ssub.s32 16, 16
          %102 = vsyncadd [#allocation4], %s101
          %s104 = sshll.u32 %s0, 4
          %s105 = int_to_ptr.vmem [resolvable:$true] %s104
          %107 = dma.vmem_to_smem %s105, 16, [#allocation3], [#allocation4]
        $region16: #{eca_forward.1} parent=11 // pred_fallthru
          _
      $region12: #{eca_forward.1} parent=5 // pred_fallthru
        _
      %p108 = scmp.lt.s32.totalorder %s9, 2
      // Predicated region
      $region17: #{eca_forward.1} parent=5 // pred_check
        %p109 = pneg %p108
      $region18: #{eca_forward.1} parent=5 // pred_check_branch
        %111 = sbr.rel (%p109) target = $region20
      $region19: #{eca_forward.1} parent=5 // pred_region
        // Predicated region
        $region21: #{eca_forward.1} parent=19 // pred_check
          %p112 = pneg %p50
        $region22: #{eca_forward.1} parent=19 // pred_check_branch
          %114 = sbr.rel (%p112) target = $region24
        $region23: #{eca_forward.1} parent=19 // pred_region
          %p115 = scmp.lt.s32.totalorder %s9, 1
          %s116 = scalar_select %p115, %s9, 1
          %s117 = smul.addr %s116, 2
          %s118 = smul.addr %s117, 4
          %s119 = scalar_lea.vmem %s1, %s118
        $region24: #{eca_forward.1} parent=19 // pred_fallthru
          _
      $region20: #{eca_forward.1} parent=5 // pred_fallthru
        _
      %p120 = scmp.le.s32.totalorder 1, %s9
      %p121 = scmp.lt.s32.totalorder %s9, 3
      %p122 = pnand %p120, %p121
      %p123 = pneg %p122
      // Predicated region
      $region25: #{eca_forward.1} parent=5 // pred_check
        _
      $region26: #{eca_forward.1} parent=5 // pred_check_branch
        %125 = sbr.rel (%p122) target = $region28
      $region27: #{eca_forward.1} parent=5 // pred_region
        %s126 = ssub.s32 %s9, 1
        // Predicated region
        $region29: #{eca_forward.1} parent=27 // pred_check
          %p127 = pneg %p30
        $region30: #{eca_forward.1} parent=27 // pred_check_branch
          %129 = sbr.rel (%p127) target = $region32
        $region31: #{eca_forward.1} parent=27 // pred_region
          %130 = dma.done [#allocation4], 16
        $region32: #{eca_forward.1} parent=27 // pred_fallthru
          _
        %131 = sfence
        %p132 = pneg %p30
        %p133 = pneg %p27
        %p134 = scmp.lt.s32.totalorder %s14, 1
        %s135 = scalar_select %p134, %s14, 1
        %s136 = smul.addr %s135, 2
        %s137 = smul.addr %s136, 4
        %s138 = scalar_lea.vmem %s1, %s137
        %p139 = pneg %p56
        %p140 = pneg %p53
        %p141 = pneg %p82
        %p142 = pneg %p79
        %p143 = scmp.lt.s32.totalorder %s14, 1
        %s144 = scalar_select %p143, %s14, 1
        %s145 = smul.addr %s144, 2
        %s146 = smul.addr %s145, 4
        %s147 = scalar_lea.vmem %s2, %s146
        %p148 = scmp.lt.s32.totalorder %s14, 1
        %s149 = scalar_select %p148, %s14, 1
        %s150 = smul.addr %s149, 2
        %s151 = smul.addr %s150, 4
        %s152 = scalar_lea.vmem %s1, %s151
        %p153 = scmp.lt.s32.totalorder %s14, 1
        %s154 = scalar_select %p153, %s14, 1
        %s155 = smul.addr %s154, 2
        %s156 = smul.addr %s155, 4
        %s157 = scalar_lea.vmem %s2, %s156
        %v158 = vld [vmem:[%s152] sm:$0xff]
        %v160 = vcombine.high %v158, %v158
        %vm162 = vcmask 1043456
        %v163 = vsel %vm162, %v158, 0.0
        %v164 = vsel %vm162, %v160, 0.0
        %v165 = vadd.f32 %v163, %v164
        %166 = vadd.xlane.f32.xlu0 %v165
        %v167 = vpop.xlane.xlu0 %166
        %v168 = vmul.f32 %v167, 0.00390625
        %vm169 = vcmask 5120
        %170 = vst.msk [vmem:[#allocation2] sm:$0x3f] %vm169, 0.0
        %vm171 = vcmask 3072
        %172 = vst.msk [vmem:[#allocation2 + $0x1] sm:$0xf] %vm171, %v168
        %s173 = sld [smem:[#allocation3]]
        %v174 = vld [vmem:[#allocation2] sm:$0xf]
        %v175 = vstv %s173
        %v176 = vmul.f32 %v175, %v174
        %s177 = sld [smem:[#allocation3 + $0x1]]
        %v178 = vstv %s177
        %v179 = vmul.f32 %v178, %v168
        %v180 = vadd.f32 %v176, %v179
        %s181 = sld [smem:[#allocation3 + $0x2]]
        %v182 = vld [vmem:[#allocation2 + $0x2] sm:$0xf]
        %v183 = vstv %s181
        %v184 = vmul.f32 %v183, %v182
        %v185 = vadd.f32 %v180, %v184
        %v186 = vxor.u32 %v185, 2147483648
        %v187 = vmul.f32 %v186, 1.442695
        %v188 = vpow.pop %v187
        %v189 = vadd.f32 %v188, 1.0
        %v190 = vrcp.pop %v189
        %v191 = vmul.f32 1.0, %v190
        %193 = vset.pattern.permute.xlu0 0
        %194 = vperm.xlu0 %193, %v191
        %v195 = vpop.permute.xlu0 %194
        %v197 = vunpack.c.l.s4 839922192
        %v198 = vunpack.c.0.s8 %v197
        %v199 = vlaneseq
        %v200 = vshrl.u32 %v199, 7
        %v201 = vsub.s32 %v198, %v200
        %v202 = vrot.slane %v195, %v201
        %v204 = vmul.f32 %v158, %v202
        %205 = vst [vmem:[%s157] sm:$0xff] %v204
        %p206 = scmp.lt.s32.totalorder %s14, 1
        %s207 = scalar_select %p206, %s14, 1
        %s208 = smul.addr %s207, 2
        %s209 = smul.addr %s208, 4
        %s210 = scalar_lea.vmem %s2, %s209
        // Predicated region
        $region33: #{eca_forward.1} parent=27 // pred_check
          %p211 = pneg %p79
        $region34: #{eca_forward.1} parent=27 // pred_check_branch
          %213 = sbr.rel (%p211) target = $region36
        $region35: #{eca_forward.1} parent=27 // pred_region
          _
        $region36: #{eca_forward.1} parent=27 // pred_fallthru
          _
      $region28: #{eca_forward.1} parent=5 // pred_fallthru
        _
      %p214 = scmp.le.s32.totalorder 2, %s9
      // Predicated region
      $region37: #{eca_forward.1} parent=5 // pred_check
        %p215 = pneg %p214
      $region38: #{eca_forward.1} parent=5 // pred_check_branch
        %217 = sbr.rel (%p215) target = $region40
      $region39: #{eca_forward.1} parent=5 // pred_region
        %s218 = ssub.s32 %s9, 2
        // Predicated region
        $region41: #{eca_forward.1} parent=39 // pred_check
          %p219 = pneg %p85
        $region42: #{eca_forward.1} parent=39 // pred_check_branch
          %221 = sbr.rel (%p219) target = $region44
        $region43: #{eca_forward.1} parent=39 // pred_region
          %p222 = scmp.lt.s32.totalorder %s15, 1
          %s223 = scalar_select %p222, %s15, 1
          %s224 = smul.addr %s223, 2
          %s225 = smul.addr %s224, 4
          %s226 = scalar_lea.vmem %s2, %s225
        $region44: #{eca_forward.1} parent=39 // pred_fallthru
          _
      $region40: #{eca_forward.1} parent=5 // pred_fallthru
        _
    $region6: #{eca_forward.1} parent=1 // loop_footer
      %s13 = sadd.s32 1, %s9
    $region7: #{eca_forward.1} parent=1 // loop_footer_branch
      %8 = sbr.rel target = $region3
    $region8: #{eca_forward.1} parent=1 // loop_exit
      _
    %227 = vsyncpa [#allocation4], 1
    %s228 = scalar_lea.sflag [#allocation4], 1
    %229 = vsyncpa %s228, 1

</llo_original>
